<compile_context>
chip_gen: v7x
topology: tpu7x:2x2x1
jax: 0.10.0
libtpu: 0.0.40
codegen_flags: <defaults>
</compile_context>

<pallas_src>
import jax
import jax.numpy as jnp
from jax.experimental import pallas as pl
from jax.experimental.pallas import tpu as pltpu

B = 2        # batch (patients)
S = 4        # number of lab statistics per variable (mean / median / min / max)
N = 3        # number of lab variables
D_FF = 32    # hidden width


# ----------------------------- fused kernel ---------------------------------
def _labstat_kernel(x_ref, w1_ref, w2_ref, b_ref, o_ref):
    """Fused  relu(x^T @ W1 + b1) @ W2 + b2  for one batch element."""
    x = x_ref[...]                          # (S, N)   raw layout from the module
    w1 = w1_ref[...]                        # (S, D_FF)    pre-transposed (in, out)
    w2 = w2_ref[...]                        # (D_FF, D_FF) pre-transposed (in, out)
    b = b_ref[...]                          # (2, D_FF)    packed [b1; b2]
    b1 = b[0:1, :]
    b2 = b[1:2, :]

    # permute(0, 2, 1) of the original module folded into the contraction:
    # contract the S axis of x against the S axis of W1 -> (N, D_FF).
    h = jax.lax.dot_general(x, w1, (((0,), (0,)), ((), ())),
                            preferred_element_type=jnp.float32)
    h = jnp.maximum(h + b1, 0.0)            # fc1 + ReLU
    # TODO(synk): nn.Dropout(head_dropout) -> identity (eval mode, no RNG).
    y = jnp.dot(h, w2, preferred_element_type=jnp.float32) + b2   # fc2
    o_ref[...] = y.astype(o_ref.dtype)


def labstat_embedder(x, w1, w2, b_slab):
    """x: (B, S, N) float32  ->  (B, N, D_FF), matching LabStat_Embedder.forward."""
    batch = x.shape[0]
    return pl.pallas_call(
        _labstat_kernel,
        out_shape=jax.ShapeDtypeStruct((batch, N, D_FF), jnp.float32),
        grid=(batch,),
        in_specs=[
            pl.BlockSpec((None, S, N), lambda b: (b, 0, 0)),     # one patient's stats
            pl.BlockSpec((S, D_FF), lambda b: (0, 0)),           # W1 (VMEM-resident)
            pl.BlockSpec((D_FF, D_FF), lambda b: (0, 0)),        # W2 (VMEM-resident)
            pl.BlockSpec((2, D_FF), lambda b: (0, 0)),           # packed [b1; b2]
        ],
        out_specs=pl.BlockSpec((None, N, D_FF), lambda b: (b, 0, 0)),
        compiler_params=pltpu.CompilerParams(
            dimension_semantics=("parallel",)),   # both TCs on v7x; harmless on v5e/v6e
    )(x, w1, w2, b_slab)


# ----------------------------- parameter init -------------------------------
def init_params(key):
    """PyTorch-style init, but weights stored pre-transposed as (in, out)."""
    k1, k2, k3, k4 = jax.random.split(key, 4)
    lim1 = 1.0 / jnp.sqrt(float(S))
    lim2 = 1.0 / jnp.sqrt(float(D_FF))
    w1 = jax.random.uniform(k1, (S, D_FF), jnp.float32, -lim1, lim1)       # fc1.weight^T
    b1 = jax.random.uniform(k2, (D_FF,), jnp.float32, -lim1, lim1)         # fc1.bias
    w2 = jax.random.uniform(k3, (D_FF, D_FF), jnp.float32, -lim2, lim2)    # fc2.weight^T
    b2 = jax.random.uniform(k4, (D_FF,), jnp.float32, -lim2, lim2)         # fc2.bias
    b_slab = jnp.stack([b1, b2], axis=0)                                   # (2, D_FF)
    return w1, w2, b_slab


# -------------------------- pure-JAX reference ------------------------------
def ref_forward(x, w1, w2, b_slab):
    xp = jnp.transpose(x, (0, 2, 1))                         # permute(0, 2, 1)
    h = jnp.einsum("bns,sf->bnf", xp, w1,
                   precision=jax.lax.Precision.HIGHEST) + b_slab[0]
    h = jnp.maximum(h, 0.0)
    y = jnp.einsum("bnf,fg->bng", h, w2,
                   precision=jax.lax.Precision.HIGHEST) + b_slab[1]
    return y


# ----------------------------------- main ------------------------------------
if __name__ == "__main__":
    key = jax.random.PRNGKey(0)
    kx, kp = jax.random.split(key)

    # x layout follows the PyTorch module: (batch, S statistics, N variables)
    x = jax.random.normal(kx, (B, S, N), jnp.float32)
    w1, w2, b_slab = init_params(kp)

    out = labstat_embedder(x, w1, w2, b_slab)
    out = jax.block_until_ready(out)

    ref = ref_forward(x, w1, w2, b_slab)

    assert out.shape == (B, N, D_FF)
    assert bool(jnp.all(jnp.isfinite(out)))
    assert bool(jnp.allclose(out, ref, rtol=1e-4, atol=1e-4))
    print("KERNEL_OK")
</pallas_src>

<mosaic_0001>
module attributes {stable_mosaic.version = 11 : i64} {
  func.func @_labstat_kernel(%arg0: i32, %arg1: memref<1x4x3xf32, #tpu.memory_space<vmem>>, %arg2: memref<4x32xf32, #tpu.memory_space<vmem>>, %arg3: memref<32x32xf32, #tpu.memory_space<vmem>>, %arg4: memref<2x32xf32, #tpu.memory_space<vmem>>, %arg5: memref<1x3x32xf32, #tpu.memory_space<vmem>>) attributes {dimension_semantics = [#tpu.dimension_semantics<parallel>], iteration_bounds = array<i64: 2>, scalar_prefetch = 0 : i64, scratch_operands = 0 : i64, tpu.core_type = #tpu.core_type<tc>, window_params = [{transform_indices = @transform_0, window_bounds = array<i64: 1, 4, 3>}, {pipeline_mode = #tpu.pipeline_mode<synchronous>, transform_indices = @transform_1, window_bounds = array<i64: 4, 32>}, {pipeline_mode = #tpu.pipeline_mode<synchronous>, transform_indices = @transform_2, window_bounds = array<i64: 32, 32>}, {pipeline_mode = #tpu.pipeline_mode<synchronous>, transform_indices = @transform_3, window_bounds = array<i64: 2, 32>}, {transform_indices = @transform_4, window_bounds = array<i64: 1, 3, 32>}]} {
    %c0 = arith.constant 0 : index
    %c0_0 = arith.constant 0 : index
    %c0_1 = arith.constant 0 : index
    %0 = vector.load %arg1[%c0, %c0_0, %c0_1] : memref<1x4x3xf32, #tpu.memory_space<vmem>>, vector<1x4x3xf32>
    %1 = vector.shape_cast %0 : vector<1x4x3xf32> to vector<4x3xf32>
    %c0_2 = arith.constant 0 : index
    %c0_3 = arith.constant 0 : index
    %2 = vector.load %arg2[%c0_2, %c0_3] : memref<4x32xf32, #tpu.memory_space<vmem>>, vector<4x32xf32>
    %c0_4 = arith.constant 0 : index
    %c0_5 = arith.constant 0 : index
    %3 = vector.load %arg3[%c0_4, %c0_5] : memref<32x32xf32, #tpu.memory_space<vmem>>, vector<32x32xf32>
    %c0_6 = arith.constant 0 : index
    %c0_7 = arith.constant 0 : index
    %4 = vector.load %arg4[%c0_6, %c0_7] : memref<2x32xf32, #tpu.memory_space<vmem>>, vector<2x32xf32>
    %5 = vector.extract_strided_slice %4 {offsets = [0, 0], sizes = [1, 32], strides = [1, 1]} : vector<2x32xf32> to vector<1x32xf32>
    %6 = vector.extract_strided_slice %4 {offsets = [1, 0], sizes = [1, 32], strides = [1, 1]} : vector<2x32xf32> to vector<1x32xf32>
    %cst = arith.constant dense<0.000000e+00> : vector<3x32xf32>
    %7 = tpu.matmul %1, %2, %cst {dimension_numbers = #tpu.dot_dimension_numbers<[0], [0], [1], [1], [0, 1, 1, 1], [], []>} : vector<4x3xf32>, vector<4x32xf32>, vector<3x32xf32> -> vector<3x32xf32>
    %8 = vector.broadcast %5 : vector<1x32xf32> to vector<3x32xf32>
    %9 = arith.addf %7, %8 : vector<3x32xf32>
    %cst_8 = arith.constant 0.000000e+00 : f32
    %10 = vector.broadcast %cst_8 : f32 to vector<3x32xf32>
    %11 = arith.maximumf %9, %10 : vector<3x32xf32>
    %cst_9 = arith.constant dense<0.000000e+00> : vector<3x32xf32>
    %12 = tpu.matmul %11, %3, %cst_9 {dimension_numbers = #tpu.dot_dimension_numbers<[1], [0], [0], [1], [0, 0, 1, 1], [], []>} : vector<3x32xf32>, vector<32x32xf32>, vector<3x32xf32> -> vector<3x32xf32>
    %13 = vector.broadcast %6 : vector<1x32xf32> to vector<3x32xf32>
    %14 = arith.addf %12, %13 : vector<3x32xf32>
    %c0_10 = arith.constant 0 : index
    %c0_11 = arith.constant 0 : index
    %c0_12 = arith.constant 0 : index
    %15 = vector.load %arg5[%c0_10, %c0_11, %c0_12] : memref<1x3x32xf32, #tpu.memory_space<vmem>>, vector<1x3x32xf32>
    %16 = vector.shape_cast %15 : vector<1x3x32xf32> to vector<3x32xf32>
    %17 = vector.shape_cast %14 : vector<3x32xf32> to vector<1x3x32xf32>
    tpu.vector_store %arg5[%c0_10, %c0_11, %c0_12], %17 {strides = array<i32>} : memref<1x3x32xf32, #tpu.memory_space<vmem>>, vector<1x3x32xf32>,
    return
  }
  func.func @transform_0(%arg0: i32) -> (i32, i32, i32) {
    %c0_i32 = arith.constant 0 : i32
    %c0_i32_0 = arith.constant 0 : i32
    %c0_i32_1 = arith.constant 0 : i32
    return %arg0, %c0_i32, %c0_i32_0 : i32, i32, i32
  }
  func.func @transform_1(%arg0: i32) -> (i32, i32) {
    %c0_i32 = arith.constant 0 : i32
    %c0_i32_0 = arith.constant 0 : i32
    %c0_i32_1 = arith.constant 0 : i32
    return %c0_i32, %c0_i32_0 : i32, i32
  }
  func.func @transform_2(%arg0: i32) -> (i32, i32) {
    %c0_i32 = arith.constant 0 : i32
    %c0_i32_0 = arith.constant 0 : i32
    %c0_i32_1 = arith.constant 0 : i32
    return %c0_i32, %c0_i32_0 : i32, i32
  }
  func.func @transform_3(%arg0: i32) -> (i32, i32) {
    %c0_i32 = arith.constant 0 : i32
    %c0_i32_0 = arith.constant 0 : i32
    %c0_i32_1 = arith.constant 0 : i32
    return %c0_i32, %c0_i32_0 : i32, i32
  }
  func.func @transform_4(%arg0: i32) -> (i32, i32, i32) {
    %c0_i32 = arith.constant 0 : i32
    %c0_i32_0 = arith.constant 0 : i32
    %c0_i32_1 = arith.constant 0 : i32
    return %arg0, %c0_i32, %c0_i32_0 : i32, i32, i32
  }
}

</mosaic_0001>

<llo_original>
// kernel: tpu_custom_call.1
$region0: #{tpu_custom_call.1}
  #allocation0 [shape = 'u32[]', space=smem, size = 0x4, offset = 0x4, fixed_abs, tag = 'smem constant byte address 0x4 - core index']
  #allocation1 [shape = 'u32[144,128]{1,0:T(1,128)}', space=vmem, size = 0x12000, scoped, tag = 'internal scratch']
  %s0 = inlined_call_operand.vmem [shape: f32[2,4,3], index: 0, kind: input, shape index: {}]
  %s1 = inlined_call_operand.vmem [shape: f32[4,32], index: 1, kind: input, shape index: {}]
  %s2 = inlined_call_operand.hbm [shape: f32[32,32], index: 2, kind: input, shape index: {}]
  %s3 = inlined_call_operand.vmem [shape: f32[2,32], index: 3, kind: input, shape index: {}]
  %s4 = inlined_call_operand.vmem [shape: f32[2,3,32], index: 4, kind: output, shape index: {}]
  %s5 = sld [smem:[#allocation0]]
  $region53: #{tpu_custom_call.1} parent=0
    _
  %s7 = ssub.s32 1, %s5
  %s8 = scalar_select 0, %s7, %s5
  $region1: #{tpu_custom_call.1} parent=0
    #allocation2 [shape = 'u8[16384]{0}', space=vmem, size = 0x4000, scoped, tag = 'input window, operand 2, single buffered']
    #allocation3 [shape = 's32[2]{0}', space=sflag, size = 0x8, scoped, tag = 'scoped memory for tpu_custom_call.1']
    %9 = vsyncpa [#allocation3], 0
    loop: start=0, step=1, limit=4
    $region2: #{tpu_custom_call.1} parent=1 // loop_pre_header
      _
    $region3: #{tpu_custom_call.1} parent=1 // loop_header
      %s11 = sphi 0, %s15
      %p12 = scmp.ge.s32.totalorder %s11, 4
      %s21 = sphi 0, %s23
      %s24 = sphi 0, %s21
      %s25 = sphi 0, %s24
      %s41 = sphi 0, %s25
      %s45 = sphi 0, %s45
      %s47 = sphi 0, %s45
      %s48 = sphi 0, %s47
      %s62 = sphi 0, %s48
      %s66 = sphi 0, %s66
      %s68 = sphi 0, %s66
      %s69 = sphi 0, %s68
      %s83 = sphi 0, %s69
      %s87 = sphi 0, %s87
      %s89 = sphi 0, %s87
      %s90 = sphi 0, %s89
      %s104 = sphi 0, %s90
      %s110 = sphi 0, %s112
      %s113 = sphi 0, %s110
      %s114 = sphi 0, %s113
      %s130 = sphi 0, %s114
    $region4: #{tpu_custom_call.1} parent=1 // loop_header_branch
      %14 = sbr.rel (%p12) target = $region8
    $region5: #{tpu_custom_call.1} parent=1 // loop_body
      %s16 = ssub.s32 %s11, 1
      %s17 = ssub.s32 %s11, 2
      %s18 = sadd.s32 %s11, 1
      %s19 = ssub.s32 %s11, %s18
      %p20 = scmp.eq.s32.totalorder %s19, 0
      %s22 = sadd.s32 %s21, 1
      %s23 = scalar_select %p20, %s21, %s22
      %p26 = pneg %p20
      %p27 = scmp.eq.s32.totalorder %s11, 1
      %p28 = por %p26, %p27
      %p29 = scmp.ne.s32.totalorder %s21, %s24
      %p30 = scmp.eq.s32.totalorder %s11, 0
      %p31 = por %p29, %p30
      %p32 = scmp.ne.s32.totalorder %s21, %s24
      %p33 = scmp.eq.s32.totalorder %s16, 1
      %p34 = por %p32, %p33
      %p35 = scmp.ne.s32.totalorder %s24, %s25
      %p36 = scmp.eq.s32.totalorder %s16, 0
      %p37 = por %p35, %p36
      %p38 = scmp.ne.s32.totalorder %s24, %s25
      %p39 = scmp.eq.s32.totalorder %s17, 1
      %p40 = por %p38, %p39
      %p42 = scmp.ne.s32.totalorder %s25, %s41
      %p43 = scmp.eq.s32.totalorder %s17, 0
      %p44 = por %p42, %p43
      %s46 = sadd.s32 %s45, 1
      %p49 = scmp.eq.s32.totalorder %s11, 1
      %p50 = scmp.ne.s32.totalorder %s45, %s47
      %p51 = scmp.eq.s32.totalorder %s11, 0
      %p52 = por %p50, %p51
      %p53 = scmp.ne.s32.totalorder %s45, %s47
      %p54 = scmp.eq.s32.totalorder %s16, 1
      %p55 = por %p53, %p54
      %p56 = scmp.ne.s32.totalorder %s47, %s48
      %p57 = scmp.eq.s32.totalorder %s16, 0
      %p58 = por %p56, %p57
      %p59 = scmp.ne.s32.totalorder %s47, %s48
      %p60 = scmp.eq.s32.totalorder %s17, 1
      %p61 = por %p59, %p60
      %p63 = scmp.ne.s32.totalorder %s48, %s62
      %p64 = scmp.eq.s32.totalorder %s17, 0
      %p65 = por %p63, %p64
      %s67 = sadd.s32 %s66, 1
      %p70 = scmp.eq.s32.totalorder %s11, 1
      %p71 = scmp.ne.s32.totalorder %s66, %s68
      %p72 = scmp.eq.s32.totalorder %s11, 0
      %p73 = por %p71, %p72
      %p74 = scmp.ne.s32.totalorder %s66, %s68
      %p75 = scmp.eq.s32.totalorder %s16, 1
      %p76 = por %p74, %p75
      %p77 = scmp.ne.s32.totalorder %s68, %s69
      %p78 = scmp.eq.s32.totalorder %s16, 0
      %p79 = por %p77, %p78
      %p80 = scmp.ne.s32.totalorder %s68, %s69
      %p81 = scmp.eq.s32.totalorder %s17, 1
      %p82 = por %p80, %p81
      %p84 = scmp.ne.s32.totalorder %s69, %s83
      %p85 = scmp.eq.s32.totalorder %s17, 0
      %p86 = por %p84, %p85
      %s88 = sadd.s32 %s87, 1
      %p91 = scmp.eq.s32.totalorder %s11, 1
      %p92 = scmp.ne.s32.totalorder %s87, %s89
      %p93 = scmp.eq.s32.totalorder %s11, 0
      %p94 = por %p92, %p93
      %p95 = scmp.ne.s32.totalorder %s87, %s89
      %p96 = scmp.eq.s32.totalorder %s16, 1
      %p97 = por %p95, %p96
      %p98 = scmp.ne.s32.totalorder %s89, %s90
      %p99 = scmp.eq.s32.totalorder %s16, 0
      %p100 = por %p98, %p99
      %p101 = scmp.ne.s32.totalorder %s89, %s90
      %p102 = scmp.eq.s32.totalorder %s17, 1
      %p103 = por %p101, %p102
      %p105 = scmp.ne.s32.totalorder %s90, %s104
      %p106 = scmp.eq.s32.totalorder %s17, 0
      %p107 = por %p105, %p106
      %s108 = ssub.s32 %s11, %s18
      %p109 = scmp.eq.s32.totalorder %s108, 0
      %s111 = sadd.s32 %s110, 1
      %s112 = scalar_select %p109, %s110, %s111
      %p115 = pneg %p109
      %p116 = scmp.eq.s32.totalorder %s11, 1
      %p117 = por %p115, %p116
      %p118 = scmp.ne.s32.totalorder %s110, %s113
      %p119 = scmp.eq.s32.totalorder %s11, 0
      %p120 = por %p118, %p119
      %p121 = scmp.ne.s32.totalorder %s110, %s113
      %p122 = scmp.eq.s32.totalorder %s16, 1
      %p123 = por %p121, %p122
      %p124 = scmp.ne.s32.totalorder %s113, %s114
      %p125 = scmp.eq.s32.totalorder %s16, 0
      %p126 = por %p124, %p125
      %p127 = scmp.ne.s32.totalorder %s113, %s114
      %p128 = scmp.eq.s32.totalorder %s17, 1
      %p129 = por %p127, %p128
      %p131 = scmp.ne.s32.totalorder %s114, %s130
      %p132 = scmp.eq.s32.totalorder %s17, 0
      %p133 = por %p131, %p132
      %p134 = scmp.le.s32.totalorder 1, %s11
      %p135 = scmp.lt.s32.totalorder %s11, 3
      %p136 = pnand %p134, %p135
      %p137 = pneg %p136
      // Predicated region
      $region9: #{tpu_custom_call.1} parent=5 // pred_check
        _
      $region10: #{tpu_custom_call.1} parent=5 // pred_check_branch
        %139 = sbr.rel (%p136) target = $region12
      $region11: #{tpu_custom_call.1} parent=5 // pred_region
        %s140 = ssub.s32 %s11, 1
        // Predicated region
        $region13: #{tpu_custom_call.1} parent=11 // pred_check
          %p141 = pneg %p58
        $region14: #{tpu_custom_call.1} parent=11 // pred_check_branch
          %143 = sbr.rel (%p141) target = $region16
        $region15: #{tpu_custom_call.1} parent=11 // pred_region
          _
        $region16: #{tpu_custom_call.1} parent=11 // pred_fallthru
          _
        // Predicated region
        $region17: #{tpu_custom_call.1} parent=11 // pred_check
          %p144 = pneg %p79
        $region18: #{tpu_custom_call.1} parent=11 // pred_check_branch
          %146 = sbr.rel (%p144) target = $region20
        $region19: #{tpu_custom_call.1} parent=11 // pred_region
          %s148 = ssub.s32 512, 512
          %149 = vsyncadd [#allocation3], %s148
          %s150 = sshll.u32 [#allocation2], 4
          %s151 = int_to_ptr.vmem [resolvable:$true] %s150
          %156 = dma.hbm_to_vmem [thread:$0]  %s2, 512, %s151, [#allocation3], 128, 128, 8
        $region20: #{tpu_custom_call.1} parent=11 // pred_fallthru
          _
        // Predicated region
        $region21: #{tpu_custom_call.1} parent=11 // pred_check
          %p157 = pneg %p100
        $region22: #{tpu_custom_call.1} parent=11 // pred_check_branch
          %159 = sbr.rel (%p157) target = $region24
        $region23: #{tpu_custom_call.1} parent=11 // pred_region
          _
        $region24: #{tpu_custom_call.1} parent=11 // pred_fallthru
          _
      $region12: #{tpu_custom_call.1} parent=5 // pred_fallthru
        _
      %p160 = scmp.lt.s32.totalorder %s11, 2
      // Predicated region
      $region25: #{tpu_custom_call.1} parent=5 // pred_check
        %p161 = pneg %p160
      $region26: #{tpu_custom_call.1} parent=5 // pred_check_branch
        %163 = sbr.rel (%p161) target = $region28
      $region27: #{tpu_custom_call.1} parent=5 // pred_region
        // Predicated region
        $region29: #{tpu_custom_call.1} parent=27 // pred_check
          %p164 = pneg %p31
        $region30: #{tpu_custom_call.1} parent=27 // pred_check_branch
          %166 = sbr.rel (%p164) target = $region32
        $region31: #{tpu_custom_call.1} parent=27 // pred_region
          %p167 = scmp.lt.s32.totalorder %s11, 1
          %s168 = scalar_select %p167, %s11, 1
          %s169 = smul.addr %s168, 4
          %s170 = scalar_lea.vmem %s0, %s169
        $region32: #{tpu_custom_call.1} parent=27 // pred_fallthru
          _
      $region28: #{tpu_custom_call.1} parent=5 // pred_fallthru
        _
      %p171 = scmp.le.s32.totalorder 1, %s11
      %p172 = scmp.lt.s32.totalorder %s11, 3
      %p173 = pnand %p171, %p172
      %p174 = pneg %p173
      // Predicated region
      $region33: #{tpu_custom_call.1} parent=5 // pred_check
        _
      $region34: #{tpu_custom_call.1} parent=5 // pred_check_branch
        %176 = sbr.rel (%p173) target = $region36
      $region35: #{tpu_custom_call.1} parent=5 // pred_region
        %s177 = ssub.s32 %s11, 1
        // Predicated region
        $region37: #{tpu_custom_call.1} parent=35 // pred_check
          %p178 = pneg %p79
        $region38: #{tpu_custom_call.1} parent=35 // pred_check_branch
          %180 = sbr.rel (%p178) target = $region40
        $region39: #{tpu_custom_call.1} parent=35 // pred_region
          %181 = dma.done [#allocation3], 512
        $region40: #{tpu_custom_call.1} parent=35 // pred_fallthru
          _
        %p182 = scmp.lt.s32.totalorder %s16, 1
        %s183 = scalar_select %p182, %s16, 1
        %s184 = smul.addr %s183, 4
        %s185 = scalar_lea.vmem %s0, %s184
        %p186 = pneg %p37
        %p187 = pneg %p34
        %p188 = pneg %p58
        %p189 = pneg %p55
        %p190 = pneg %p79
        %p191 = pneg %p76
        %p192 = pneg %p100
        %p193 = pneg %p97
        %p194 = pneg %p126
        %p195 = pneg %p123
        %p196 = scmp.lt.s32.totalorder %s16, 1
        %s197 = scalar_select %p196, %s16, 1
        %s198 = smul.addr %s197, 4
        %s199 = scalar_lea.vmem %s4, %s198
        %p200 = scmp.lt.s32.totalorder %s16, 1
        %s201 = scalar_select %p200, %s16, 1
        %s202 = smul.addr %s201, 4
        %s203 = scalar_lea.vmem %s0, %s202
        %p204 = scmp.lt.s32.totalorder %s16, 1
        %s205 = scalar_select %p204, %s16, 1
        %s206 = smul.addr %s205, 4
        %s207 = scalar_lea.vmem %s4, %s206
        %v208 = vld [vmem:[%s203] sm:$0xf]
        %v209 = vld [vmem:[%s1] sm:$0xf]
        %v210 = vld [vmem:[#allocation2] sm:$0xff]
        %v211 = vld [vmem:[#allocation2 + $0x8] sm:$0xff]
        %v212 = vld [vmem:[#allocation2 + $0x10] sm:$0xff]
        %v213 = vld [vmem:[#allocation2 + $0x18] sm:$0xff]
        %v214 = vld [vmem:[%s3] sm:$0x3]
        %v215 = vlaneseq
        %v216 = vshrl.u32 %v215, 7
        %v217 = vsub.s32 0, %v216
        %v218 = vrot.slane %v214, %v217
        %219 = vxpose.xlu0.b32.start [1/16] %v208, 128
        %220 = vxpose.xlu0.b32.cont [2/16] 0.0, 128
        %221 = vxpose.xlu0.b32.cont [3/16] 0.0, 128
        %222 = vxpose.xlu0.b32.cont [4/16] 0.0, 128
        %223 = vxpose.xlu0.b32.cont [5/16] 0.0, 128
        %224 = vxpose.xlu0.b32.cont [6/16] 0.0, 128
        %225 = vxpose.xlu0.b32.cont [7/16] 0.0, 128
        %226 = vxpose.xlu0.b32.cont [8/16] 0.0, 128
        %227 = vxpose.xlu0.b32.cont [9/16] 0.0, 128
        %228 = vxpose.xlu0.b32.cont [10/16] 0.0, 128
        %229 = vxpose.xlu0.b32.cont [11/16] 0.0, 128
        %230 = vxpose.xlu0.b32.cont [12/16] 0.0, 128
        %231 = vxpose.xlu0.b32.cont [13/16] 0.0, 128
        %232 = vxpose.xlu0.b32.cont [14/16] 0.0, 128
        %233 = vxpose.xlu0.b32.cont [15/16] 0.0, 128
        %234 = vxpose.xlu0.b32.end [16/16] 0.0, 128
        %v235 = vpop.trf.xlu0
        %v236 = vpop.trf.xlu0
        %v237 = vpop.trf.xlu0
        %v238 = vpop.trf.xlu0
        %v239 = vpop.trf.xlu0
        %v240 = vpop.trf.xlu0
        %v241 = vpop.trf.xlu0
        %v242 = vpop.trf.xlu0
        %v243 = vpop.trf.xlu0
        %v244 = vpop.trf.xlu0
        %v245 = vpop.trf.xlu0
        %v246 = vpop.trf.xlu0
        %v247 = vpop.trf.xlu0
        %v248 = vpop.trf.xlu0
        %v249 = vpop.trf.xlu0
        %v250 = vpop.trf.xlu0
        %vm251 = vcmask 31744
        %v253 = vsel %vm251, %v235, 0
        %vm255 = vcmask 1043456
        %v257 = vsel %vm255, %v209, 0
        %259 = vmatprep.subr.mxu0 0.0
        %260 = vmatpush1.msra.mxu0 %v257
        %261 = vmatprep.subr.mxu0 0.0
        %262 = vmatpush1.msra.mxu0 0.0
        %263 = vmatprep.subr.mxu0 0.0
        %264 = vmatpush1.msra.mxu0 0.0
        %265 = vmatprep.subr.mxu0 0.0
        %266 = vmatpush1.msra.mxu0 0.0
        %267 = vmatprep.subr.mxu0 0.0
        %268 = vmatpush1.msra.mxu0 0.0
        %269 = vmatprep.subr.mxu0 0.0
        %270 = vmatpush1.msra.mxu0 0.0
        %271 = vmatprep.subr.mxu0 0.0
        %272 = vmatpush1.msra.mxu0 0.0
        %273 = vmatprep.subr.mxu0 0.0
        %274 = vmatpush1.msra.mxu0 0.0
        %275 = vmatprep.subr.mxu0 0.0
        %276 = vmatpush1.msra.mxu0 0.0
        %277 = vmatprep.subr.mxu0 0.0
        %278 = vmatpush1.msra.mxu0 0.0
        %279 = vmatprep.subr.mxu0 0.0
        %280 = vmatpush1.msra.mxu0 0.0
        %281 = vmatprep.subr.mxu0 0.0
        %282 = vmatpush1.msra.mxu0 0.0
        %283 = vmatprep.subr.mxu0 0.0
        %284 = vmatpush1.msra.mxu0 0.0
        %285 = vmatprep.subr.mxu0 0.0
        %286 = vmatpush1.msra.mxu0 0.0
        %287 = vmatprep.subr.mxu0 0.0
        %288 = vmatpush1.msra.mxu0 0.0
        %289 = vmatprep.subr.mxu0 0.0
        %290 = vmatpush1.msra.mxu0 0.0
        %291 = vmatprep.subr.mxu0 0.0
        %292 = vmatpush1.msra.mxu0 0.0
        %293 = vmatprep.subr.mxu0 0.0
        %294 = vmatpush1.msra.mxu0 0.0
        %295 = vmatprep.subr.mxu0 0.0
        %296 = vmatpush1.msra.mxu0 0.0
        %297 = vmatprep.subr.mxu0 0.0
        %298 = vmatpush1.msra.mxu0 0.0
        %299 = vmatprep.subr.mxu0 0.0
        %300 = vmatpush1.msra.mxu0 0.0
        %301 = vmatprep.subr.mxu0 0.0
        %302 = vmatpush1.msra.mxu0 0.0
        %303 = vmatprep.subr.mxu0 0.0
        %304 = vmatpush1.msra.mxu0 0.0
        %305 = vmatprep.subr.mxu0 0.0
        %306 = vmatpush1.msra.mxu0 0.0
        %307 = vmatprep.subr.mxu0 0.0
        %308 = vmatpush1.msra.mxu0 0.0
        %309 = vmatprep.subr.mxu0 0.0
        %310 = vmatpush1.msra.mxu0 0.0
        %311 = vmatprep.subr.mxu0 0.0
        %312 = vmatpush1.msra.mxu0 0.0
        %313 = vmatprep.subr.mxu0 0.0
        %314 = vmatpush1.msra.mxu0 0.0
        %315 = vmatprep.subr.mxu0 0.0
        %316 = vmatpush1.msra.mxu0 0.0
        %317 = vmatprep.subr.mxu0 0.0
        %318 = vmatpush1.msra.mxu0 0.0
        %319 = vmatprep.subr.mxu0 0.0
        %320 = vmatpush1.msra.mxu0 0.0
        %321 = vmatprep.subr.mxu0 0.0
        %322 = vmatpush1.msra.mxu0 0.0
        %323 = vmatprep.mubr.f32.mxu0 0.0
        %324 = vmatmul.mubr.f32.gmra.mrb[0].mxu0 %v253
        %v325 = vpop.f32.mrb[0].mxu0
        %v326 = vadd.f32 %v218, %v325
        %v327 = vpop.f32.mrb[0].mxu0
        %328 = vdwg.mxu0
        %v329 = vmax.f32 %v326, 0.0
        %v330 = vlaneseq
        %v331 = vshrl.u32 %v330, 7
        %v332 = vsub.s32 1, %v331
        %v333 = vrot.slane %v214, %v332
        %vm334 = vcmask 261120
        %v336 = vsel %vm334, %v329, 0
        %338 = vmatprep.subr.mxu0 0.0
        %339 = vmatpush1.msra.mxu0 %v210
        %340 = vmatprep.subr.mxu0 0.0
        %341 = vmatpush1.msra.mxu0 %v211
        %342 = vmatprep.subr.mxu0 0.0
        %343 = vmatpush1.msra.mxu0 %v212
        %344 = vmatprep.subr.mxu0 0.0
        %345 = vmatpush1.msra.mxu0 %v213
        %346 = vmatprep.subr.mxu0 0.0
        %347 = vmatpush1.msra.mxu0 0.0
        %348 = vmatprep.subr.mxu0 0.0
        %349 = vmatpush1.msra.mxu0 0.0
        %350 = vmatprep.subr.mxu0 0.0
        %351 = vmatpush1.msra.mxu0 0.0
        %352 = vmatprep.subr.mxu0 0.0
        %353 = vmatpush1.msra.mxu0 0.0
        %354 = vmatprep.subr.mxu0 0.0
        %355 = vmatpush1.msra.mxu0 0.0
        %356 = vmatprep.subr.mxu0 0.0
        %357 = vmatpush1.msra.mxu0 0.0
        %358 = vmatprep.subr.mxu0 0.0
        %359 = vmatpush1.msra.mxu0 0.0
        %360 = vmatprep.subr.mxu0 0.0
        %361 = vmatpush1.msra.mxu0 0.0
        %362 = vmatprep.subr.mxu0 0.0
        %363 = vmatpush1.msra.mxu0 0.0
        %364 = vmatprep.subr.mxu0 0.0
        %365 = vmatpush1.msra.mxu0 0.0
        %366 = vmatprep.subr.mxu0 0.0
        %367 = vmatpush1.msra.mxu0 0.0
        %368 = vmatprep.subr.mxu0 0.0
        %369 = vmatpush1.msra.mxu0 0.0
        %370 = vmatprep.subr.mxu0 0.0
        %371 = vmatpush1.msra.mxu0 0.0
        %372 = vmatprep.subr.mxu0 0.0
        %373 = vmatpush1.msra.mxu0 0.0
        %374 = vmatprep.subr.mxu0 0.0
        %375 = vmatpush1.msra.mxu0 0.0
        %376 = vmatprep.subr.mxu0 0.0
        %377 = vmatpush1.msra.mxu0 0.0
        %378 = vmatprep.subr.mxu0 0.0
        %379 = vmatpush1.msra.mxu0 0.0
        %380 = vmatprep.subr.mxu0 0.0
        %381 = vmatpush1.msra.mxu0 0.0
        %382 = vmatprep.subr.mxu0 0.0
        %383 = vmatpush1.msra.mxu0 0.0
        %384 = vmatprep.subr.mxu0 0.0
        %385 = vmatpush1.msra.mxu0 0.0
        %386 = vmatprep.subr.mxu0 0.0
        %387 = vmatpush1.msra.mxu0 0.0
        %388 = vmatprep.subr.mxu0 0.0
        %389 = vmatpush1.msra.mxu0 0.0
        %390 = vmatprep.subr.mxu0 0.0
        %391 = vmatpush1.msra.mxu0 0.0
        %392 = vmatprep.subr.mxu0 0.0
        %393 = vmatpush1.msra.mxu0 0.0
        %394 = vmatprep.subr.mxu0 0.0
        %395 = vmatpush1.msra.mxu0 0.0
        %396 = vmatprep.subr.mxu0 0.0
        %397 = vmatpush1.msra.mxu0 0.0
        %398 = vmatprep.subr.mxu0 0.0
        %399 = vmatpush1.msra.mxu0 0.0
        %400 = vmatprep.subr.mxu0 0.0
        %401 = vmatpush1.msra.mxu0 0.0
        %402 = vmatprep.mubr.f32.mxu0 0.0
        %403 = vmatmul.mubr.f32.gmra.mrb[0].mxu0 %v336
        %v404 = vpop.f32.mrb[0].mxu0
        %v405 = vadd.f32 %v333, %v404
        %v406 = vpop.f32.mrb[0].mxu0
        %407 = vdwg.mxu0
        %vm408 = vcmask 256000
        %409 = vst.msk [vmem:[%s207] sm:$0x7] %vm408, %v405
        %p410 = scmp.lt.s32.totalorder %s16, 1
        %s411 = scalar_select %p410, %s16, 1
        %s412 = smul.addr %s411, 4
        %s413 = scalar_lea.vmem %s4, %s412
        // Predicated region
        $region41: #{tpu_custom_call.1} parent=35 // pred_check
          %p414 = pneg %p123
        $region42: #{tpu_custom_call.1} parent=35 // pred_check_branch
          %416 = sbr.rel (%p414) target = $region44
        $region43: #{tpu_custom_call.1} parent=35 // pred_region
          _
        $region44: #{tpu_custom_call.1} parent=35 // pred_fallthru
          _
      $region36: #{tpu_custom_call.1} parent=5 // pred_fallthru
        _
      %p417 = scmp.le.s32.totalorder 2, %s11
      // Predicated region
      $region45: #{tpu_custom_call.1} parent=5 // pred_check
        %p418 = pneg %p417
      $region46: #{tpu_custom_call.1} parent=5 // pred_check_branch
        %420 = sbr.rel (%p418) target = $region48
      $region47: #{tpu_custom_call.1} parent=5 // pred_region
        %s421 = ssub.s32 %s11, 2
        // Predicated region
        $region49: #{tpu_custom_call.1} parent=47 // pred_check
          %p422 = pneg %p129
        $region50: #{tpu_custom_call.1} parent=47 // pred_check_branch
          %424 = sbr.rel (%p422) target = $region52
        $region51: #{tpu_custom_call.1} parent=47 // pred_region
          %p425 = scmp.lt.s32.totalorder %s17, 1
          %s426 = scalar_select %p425, %s17, 1
          %s427 = smul.addr %s426, 4
          %s428 = scalar_lea.vmem %s4, %s427
        $region52: #{tpu_custom_call.1} parent=47 // pred_fallthru
          _
      $region48: #{tpu_custom_call.1} parent=5 // pred_fallthru
        _
    $region6: #{tpu_custom_call.1} parent=1 // loop_footer
      %s15 = sadd.s32 1, %s11
    $region7: #{tpu_custom_call.1} parent=1 // loop_footer_branch
      %10 = sbr.rel target = $region3
    $region8: #{tpu_custom_call.1} parent=1 // loop_exit
      _
    %429 = vsyncpa [#allocation3], 1
    %s430 = scalar_lea.sflag [#allocation3], 1
    %431 = vsyncpa %s430, 1

</llo_original>
